<compile_context>
chip_gen: v6e
topology: v6e:2x2x1
jax: 0.10.0
libtpu: 0.0.40
codegen_flags: <defaults>
</compile_context>

<pallas_src>
import math
import functools

import jax
import jax.numpy as jnp
import numpy as np
from jax import lax
from jax.experimental import pallas as pl
from jax.experimental.pallas import tpu as pltpu

_VMEM_LIMIT = 48 * 1024 * 1024  # > default scoped limit, < physical on all gens


def _pick_tile(n, preferred):
    """Largest power-of-two tile <= preferred (>=128) dividing n, else full n."""
    t = preferred
    while t >= 128:
        if n % t == 0:
            return t
        t //= 2
    return n


# --------------------------------------------------------------------------
# Tiled matmul kernels (bf16 operands, f32 accumulation, optional residual)
# --------------------------------------------------------------------------
def _mm_kernel(x_ref, w_ref, o_ref, acc_ref):
    @pl.when(pl.program_id(2) == 0)
    def _():
        acc_ref[...] = jnp.zeros_like(acc_ref)

    acc_ref[...] += jnp.dot(x_ref[...], w_ref[...],
                            preferred_element_type=jnp.float32)

    @pl.when(pl.program_id(2) == pl.num_programs(2) - 1)
    def _():
        o_ref[...] = acc_ref[...].astype(o_ref.dtype)


def _mm_res_kernel(x_ref, w_ref, r_ref, o_ref, acc_ref):
    @pl.when(pl.program_id(2) == 0)
    def _():
        acc_ref[...] = jnp.zeros_like(acc_ref)

    acc_ref[...] += jnp.dot(x_ref[...], w_ref[...],
                            preferred_element_type=jnp.float32)

    @pl.when(pl.program_id(2) == pl.num_programs(2) - 1)
    def _():
        o_ref[...] = (acc_ref[...] + r_ref[...]).astype(o_ref.dtype)


def _matmul(x, w, *, out_dtype, residual=None,
            tm_pref=256, tn_pref=256, tk_pref=512):
    M, K = x.shape
    K2, N = w.shape
    assert K == K2
    tm = _pick_tile(M, tm_pref)
    tn = _pick_tile(N, tn_pref)
    tk = _pick_tile(K, tk_pref)
    grid = (M // tm, N // tn, K // tk)

    in_specs = [pl.BlockSpec((tm, tk), lambda i, j, k: (i, k)),
                pl.BlockSpec((tk, tn), lambda i, j, k: (k, j))]
    args = [x, w]
    if residual is not None:
        in_specs.append(pl.BlockSpec((tm, tn), lambda i, j, k: (i, j)))
        args.append(residual)
        kernel = _mm_res_kernel
    else:
        kernel = _mm_kernel

    return pl.pallas_call(
        kernel,
        out_shape=jax.ShapeDtypeStruct((M, N), out_dtype),
        grid=grid,
        in_specs=in_specs,
        out_specs=pl.BlockSpec((tm, tn), lambda i, j, k: (i, j)),
        scratch_shapes=[pltpu.VMEM((tm, tn), jnp.float32)],
        compiler_params=pltpu.CompilerParams(
            dimension_semantics=("parallel", "parallel", "arbitrary"),
            vmem_limit_bytes=_VMEM_LIMIT),
    )(*args)


# --------------------------------------------------------------------------
# RMSNorm kernel (f32 math, bf16 output feeding the bf16 matmuls)
# --------------------------------------------------------------------------
def _rmsnorm_kernel(x_ref, w_ref, o_ref, *, eps):
    x = x_ref[...]
    ms = jnp.mean(x * x, axis=-1, keepdims=True)
    y = x * lax.rsqrt(ms + eps)
    o_ref[...] = (y * w_ref[...]).astype(o_ref.dtype)


def _rmsnorm(x2d, w_row, eps=1e-5):
    M, D = x2d.shape
    tm = _pick_tile(M, 256)
    return pl.pallas_call(
        functools.partial(_rmsnorm_kernel, eps=eps),
        out_shape=jax.ShapeDtypeStruct((M, D), jnp.bfloat16),
        grid=(M // tm,),
        in_specs=[pl.BlockSpec((tm, D), lambda i: (i, 0)),
                  pl.BlockSpec((1, D), lambda i: (0, 0))],
        out_specs=pl.BlockSpec((tm, D), lambda i: (i, 0)),
        compiler_params=pltpu.CompilerParams(
            dimension_semantics=("parallel",),
            vmem_limit_bytes=_VMEM_LIMIT),
    )(x2d, w_row)


# --------------------------------------------------------------------------
# Attention kernel: one batch element / grid step, all heads, causal softmax.
# q/k arrive column-permuted to [real | imag] per head (folded into Wq/Wk).
# --------------------------------------------------------------------------
def _attn_kernel(qkv_ref, cos_ref, sin_ref, o_ref, *, n_heads, head_dim, scale):
    sl = qkv_ref.shape[0]
    dim = n_heads * head_dim
    hd2 = head_dim // 2

    qkv = qkv_ref[...]                 # (sl, 3*dim) bf16
    cos = cos_ref[...]                 # (sl, hd2)   f32
    sin = sin_ref[...]

    row = lax.broadcasted_iota(jnp.int32, (sl, sl), 0)
    col = lax.broadcasted_iota(jnp.int32, (sl, sl), 1)
    causal = col <= row

    outs = []
    # TODO(synk): for long sequences / many heads, switch to a flash-style
    # online-softmax with a kv-tile grid axis and causal tile skipping.
    for h in range(n_heads):
        qh = qkv[:, h * head_dim:(h + 1) * head_dim].astype(jnp.float32)
        kh = qkv[:, dim + h * head_dim: dim + (h + 1) * head_dim].astype(jnp.float32)
        vh = qkv[:, 2 * dim + h * head_dim: 2 * dim + (h + 1) * head_dim]  # bf16

        # RoPE in [real | imag] layout (f32 on the VPU).
        qr, qi = qh[:, :hd2], qh[:, hd2:]
        kr, ki = kh[:, :hd2], kh[:, hd2:]
        q_out_r = qr * cos - qi * sin
        q_out_i = qr * sin + qi * cos
        k_out_i = kr * sin + ki * cos
        k_out_r = q_out_r  # reference reuses xq_out_r for the key real part; reproduced.

        q_rot = (jnp.concatenate([q_out_r, q_out_i], axis=-1) * scale
                 ).astype(jnp.bfloat16)
        k_rot = jnp.concatenate([k_out_r, k_out_i], axis=-1).astype(jnp.bfloat16)

        # q @ k^T without an explicit transpose (contract last dims of both).
        s = lax.dot_general(q_rot, k_rot, (((1,), (1,)), ((), ())),
                            preferred_element_type=jnp.float32)
        s = jnp.where(causal, s, -jnp.inf)
        m = jnp.max(s, axis=-1, keepdims=True)
        p = jnp.exp(s - m)
        denom = jnp.sum(p, axis=-1, keepdims=True)
        attn = (p * pl.reciprocal(denom, approx=True)).astype(jnp.bfloat16)

        outs.append(jnp.dot(attn, vh, preferred_element_type=jnp.float32))

    # Single lane-dense (sl, n_heads*head_dim) store.
    o_ref[...] = jnp.concatenate(outs, axis=-1).astype(o_ref.dtype)


def _attention(qkv, freqs_cos, freqs_sin, n_heads, head_dim):
    bsz, sl, three_dim = qkv.shape
    dim = n_heads * head_dim
    assert three_dim == 3 * dim
    hd2 = head_dim // 2
    kernel = functools.partial(_attn_kernel, n_heads=n_heads,
                               head_dim=head_dim,
                               scale=1.0 / math.sqrt(head_dim))
    return pl.pallas_call(
        kernel,
        out_shape=jax.ShapeDtypeStruct((bsz, sl, dim), jnp.bfloat16),
        grid=(bsz,),
        in_specs=[pl.BlockSpec((None, sl, 3 * dim), lambda b: (b, 0, 0)),
                  pl.BlockSpec((sl, hd2), lambda b: (0, 0)),
                  pl.BlockSpec((sl, hd2), lambda b: (0, 0))],
        out_specs=pl.BlockSpec((None, sl, dim), lambda b: (b, 0, 0)),
        compiler_params=pltpu.CompilerParams(
            dimension_semantics=("parallel",),
            vmem_limit_bytes=_VMEM_LIMIT),
    )(qkv, freqs_cos, freqs_sin)


# --------------------------------------------------------------------------
# SwiGLU gate kernel: silu(h1) * h3, reading both halves of the fused h13
# array via two BlockSpecs on the same input (no wrapper-side slicing).
# --------------------------------------------------------------------------
def _swiglu_kernel(a_ref, b_ref, o_ref):
    a = a_ref[...].astype(jnp.float32)
    b = b_ref[...].astype(jnp.float32)
    sig = 1.0 / (1.0 + jnp.exp(-a))
    o_ref[...] = (a * sig * b).astype(o_ref.dtype)


def _swiglu(h13, hidden):
    M, N2 = h13.shape
    assert N2 == 2 * hidden
    tm = _pick_tile(M, 256)
    tn = _pick_tile(hidden, 512)
    nj = hidden // tn
    return pl.pallas_call(
        _swiglu_kernel,
        out_shape=jax.ShapeDtypeStruct((M, hidden), jnp.bfloat16),
        grid=(M // tm, nj),
        in_specs=[pl.BlockSpec((tm, tn), lambda i, j: (i, j)),
                  pl.BlockSpec((tm, tn), lambda i, j: (i, j + nj))],
        out_specs=pl.BlockSpec((tm, tn), lambda i, j: (i, j)),
        compiler_params=pltpu.CompilerParams(
            dimension_semantics=("parallel", "parallel"),
            vmem_limit_bytes=_VMEM_LIMIT),
    )(h13, h13)


# --------------------------------------------------------------------------
# Parameter preparation (one-time, host/XLA side):
#  * fold the RoPE even/odd de-interleave into the columns of Wq / Wk,
#  * fuse Wq|Wk|Wv and W1|W3, cast matmul weights to bf16.
# --------------------------------------------------------------------------
def prepare_params(raw, n_heads, head_dim):
    hd = head_dim
    idx = np.concatenate([np.arange(0, hd, 2), np.arange(1, hd, 2)])
    perm = (np.arange(n_heads)[:, None] * hd + idx[None, :]).reshape(-1)
    wq_p = raw["wq"][:, perm]
    wk_p = raw["wk"][:, perm]
    return {
        "attn_norm_w": raw["attn_norm_w"].reshape(1, -1).astype(jnp.float32),
        "ffn_norm_w": raw["ffn_norm_w"].reshape(1, -1).astype(jnp.float32),
        "w_qkv": jnp.concatenate([wq_p, wk_p, raw["wv"]], axis=1).astype(jnp.bfloat16),
        "wo": raw["wo"].astype(jnp.bfloat16),
        "w13": jnp.concatenate([raw["w1"], raw["w3"]], axis=1).astype(jnp.bfloat16),
        "w2": raw["w2"].astype(jnp.bfloat16),
    }


# --------------------------------------------------------------------------
# TransformerBlock forward
# --------------------------------------------------------------------------
def transformer_block_forward(x, freqs_cos, freqs_sin, params, n_heads, n_kv_heads):
    bsz, sl, dim = x.shape
    head_dim = dim // n_heads
    # The reference rotary path (xq_out_r reuse) only shape-checks when
    # n_kv_heads == n_heads, so repeat_kv is an identity.
    assert n_kv_heads == n_heads
    M = bsz * sl
    x2d = x.reshape(M, dim)

    # ---- attention sub-block: h = x + Wo(attn(RoPE(Wq xn, Wk xn), Wv xn)) ----
    xn = _rmsnorm(x2d, params["attn_norm_w"])                         # bf16 (M, dim)
    qkv = _matmul(xn, params["w_qkv"], out_dtype=jnp.bfloat16)        # (M, 3*dim)
    qkv = qkv.reshape(bsz, sl, 3 * dim)                               # free reshape
    attn = _attention(qkv, freqs_cos, freqs_sin, n_heads, head_dim)   # bf16 (bsz, sl, dim)
    h2d = _matmul(attn.reshape(M, dim), params["wo"],
                  out_dtype=jnp.float32, residual=x2d)                # x + attn_out

    # ---- FFN sub-block: out = h + W2(silu(W1 hn) * (W3 hn)) ----
    hidden = params["w13"].shape[1] // 2
    hn = _rmsnorm(h2d, params["ffn_norm_w"])                          # bf16 (M, dim)
    h13 = _matmul(hn, params["w13"], out_dtype=jnp.bfloat16)          # (M, 2*hidden)
    gated = _swiglu(h13, hidden)                                      # bf16 (M, hidden)
    out2d = _matmul(gated, params["w2"],
                    out_dtype=jnp.float32, residual=h2d)              # h + ffn_out
    # TODO(synk): attn_dropout / resid_dropout / ffn dropout are eval-mode identities.
    return out2d.reshape(bsz, sl, dim)


# --------------------------------------------------------------------------
# Pure-JAX f32 reference (mirrors the PyTorch module, including its quirks)
# --------------------------------------------------------------------------
def _rmsnorm_ref(x, w, eps=1e-5):
    ms = jnp.mean(x * x, axis=-1, keepdims=True)
    return x * lax.rsqrt(ms + eps) * w


def _attention_ref(x, fc, fs, raw, n_heads, head_dim):
    bsz, sl, dim = x.shape
    xq = (x @ raw["wq"]).reshape(bsz, sl, n_heads, head_dim)
    xk = (x @ raw["wk"]).reshape(bsz, sl, n_heads, head_dim)
    xv = (x @ raw["wv"]).reshape(bsz, sl, n_heads, head_dim)

    xq_r, xq_i = xq[..., 0::2], xq[..., 1::2]
    xk_r, xk_i = xk[..., 0::2], xk[..., 1::2]
    c = fc[None, :, None, :]
    s = fs[None, :, None, :]
    xq_out_r = xq_r * c - xq_i * s
    xq_out_i = xq_r * s + xq_i * c
    xk_out_i = xk_r * s + xk_i * c
    xq_out = jnp.stack([xq_out_r, xq_out_i], -1).reshape(bsz, sl, n_heads, head_dim)
    xk_out = jnp.stack([xq_out_r, xk_out_i], -1).reshape(bsz, sl, n_heads, head_dim)

    q = xq_out.transpose(0, 2, 1, 3)
    k = xk_out.transpose(0, 2, 1, 3)
    v = xv.transpose(0, 2, 1, 3)
    scores = jnp.einsum("bhqd,bhkd->bhqk", q, k) / math.sqrt(head_dim)
    mask = jnp.tril(jnp.ones((sl, sl), dtype=bool))
    scores = jnp.where(mask[None, None], scores, -jnp.inf)
    attn = jax.nn.softmax(scores, axis=-1)
    out = jnp.einsum("bhqk,bhkd->bhqd", attn, v)
    out = out.transpose(0, 2, 1, 3).reshape(bsz, sl, dim)
    return out @ raw["wo"]


def transformer_block_reference(x, fc, fs, raw, n_heads, head_dim):
    h = x + _attention_ref(_rmsnorm_ref(x, raw["attn_norm_w"]), fc, fs,
                           raw, n_heads, head_dim)
    hn = _rmsnorm_ref(h, raw["ffn_norm_w"])
    ffn = (jax.nn.silu(hn @ raw["w1"]) * (hn @ raw["w3"])) @ raw["w2"]
    return h + ffn


def precompute_freqs(head_dim, seq_len, theta=10000.0):
    inv = 1.0 / (theta ** (jnp.arange(0, head_dim, 2, dtype=jnp.float32)
                           [: head_dim // 2] / head_dim))
    t = jnp.arange(seq_len, dtype=jnp.float32)
    f = jnp.outer(t, inv)
    return jnp.cos(f), jnp.sin(f)


# --------------------------------------------------------------------------
# Main
# --------------------------------------------------------------------------
if __name__ == "__main__":
    bsz, sl = 2, 64
    dim, n_heads, n_kv_heads = 256, 4, 4
    multiple_of = 128
    head_dim = dim // n_heads
    hidden_dim = 4 * dim
    hidden_dim = int(2 * hidden_dim / 3)
    hidden_dim = multiple_of * ((hidden_dim + multiple_of - 1) // multiple_of)

    key = jax.random.PRNGKey(0)
    ks = jax.random.split(key, 10)
    x = jax.random.normal(ks[0], (bsz, sl, dim), dtype=jnp.float32)
    # Weights stored as (in_features, out_features) = nn.Linear weight^T.
    raw = {
        "wq": 0.02 * jax.random.normal(ks[1], (dim, n_heads * head_dim), jnp.float32),
        "wk": 0.02 * jax.random.normal(ks[2], (dim, n_kv_heads * head_dim), jnp.float32),
        "wv": 0.02 * jax.random.normal(ks[3], (dim, n_kv_heads * head_dim), jnp.float32),
        "wo": 0.02 * jax.random.normal(ks[4], (n_heads * head_dim, dim), jnp.float32),
        "w1": 0.02 * jax.random.normal(ks[5], (dim, hidden_dim), jnp.float32),
        "w3": 0.02 * jax.random.normal(ks[6], (dim, hidden_dim), jnp.float32),
        "w2": 0.02 * jax.random.normal(ks[7], (hidden_dim, dim), jnp.float32),
        "attn_norm_w": 1.0 + 0.1 * jax.random.normal(ks[8], (dim,), jnp.float32),
        "ffn_norm_w": 1.0 + 0.1 * jax.random.normal(ks[9], (dim,), jnp.float32),
    }
    freqs_cos, freqs_sin = precompute_freqs(head_dim, sl)
    params = prepare_params(raw, n_heads, head_dim)

    out = transformer_block_forward(x, freqs_cos, freqs_sin, params,
                                    n_heads, n_kv_heads)
    out = jax.block_until_ready(out)

    ref = transformer_block_reference(x, freqs_cos, freqs_sin, raw,
                                      n_heads, head_dim)
    np.testing.assert_allclose(np.asarray(out), np.asarray(ref),
                               rtol=2e-2, atol=2e-2)
    print("KERNEL_OK")
</pallas_src>

<mosaic_0001>
module attributes {stable_mosaic.version = 11 : i64} {
  func.func @_rmsnorm_kernel(%arg0: i32, %arg1: memref<128x256xf32, #tpu.memory_space<vmem>>, %arg2: memref<1x256xf32, #tpu.memory_space<vmem>>, %arg3: memref<128x256xbf16, #tpu.memory_space<vmem>>) attributes {dimension_semantics = [#tpu.dimension_semantics<parallel>], iteration_bounds = array<i64: 1>, scalar_prefetch = 0 : i64, scratch_operands = 0 : i64, tpu.core_type = #tpu.core_type<tc>, window_params = [{transform_indices = @transform_0, window_bounds = array<i64: 128, 256>}, {pipeline_mode = #tpu.pipeline_mode<synchronous>, transform_indices = @transform_1, window_bounds = array<i64: 1, 256>}, {transform_indices = @transform_2, window_bounds = array<i64: 128, 256>}]} {
    %c0 = arith.constant 0 : index
    %c0_0 = arith.constant 0 : index
    %0 = vector.load %arg1[%c0, %c0_0] : memref<128x256xf32, #tpu.memory_space<vmem>>, vector<128x256xf32>
    %1 = arith.mulf %0, %0 : vector<128x256xf32>
    %cst = arith.constant dense<0.000000e+00> : vector<128xf32>
    %2 = vector.multi_reduction <add>, %1, %cst [1] : vector<128x256xf32> to vector<128xf32>
    %3 = vector.shape_cast %2 : vector<128xf32> to vector<128x1xf32>
    %cst_1 = arith.constant 2.560000e+02 : f32
    %4 = vector.broadcast %cst_1 : f32 to vector<128x1xf32>
    %5 = arith.divf %3, %4 : vector<128x1xf32>
    %cst_2 = arith.constant 9.99999974E-6 : f32
    %6 = vector.broadcast %cst_2 : f32 to vector<128x1xf32>
    %7 = arith.addf %5, %6 : vector<128x1xf32>
    %8 = math.rsqrt %7 : vector<128x1xf32>
    %9 = vector.broadcast %8 : vector<128x1xf32> to vector<128x256xf32>
    %10 = arith.mulf %0, %9 : vector<128x256xf32>
    %c0_3 = arith.constant 0 : index
    %c0_4 = arith.constant 0 : index
    %11 = vector.load %arg2[%c0_3, %c0_4] : memref<1x256xf32, #tpu.memory_space<vmem>>, vector<1x256xf32>
    %12 = vector.broadcast %11 : vector<1x256xf32> to vector<128x256xf32>
    %13 = arith.mulf %10, %12 : vector<128x256xf32>
    %14 = arith.truncf %13 : vector<128x256xf32> to vector<128x256xbf16>
    %c0_5 = arith.constant 0 : index
    %c0_6 = arith.constant 0 : index
    %15 = vector.load %arg3[%c0_5, %c0_6] : memref<128x256xbf16, #tpu.memory_space<vmem>>, vector<128x256xbf16>
    tpu.vector_store %arg3[%c0_5, %c0_6], %14 {strides = array<i32>} : memref<128x256xbf16, #tpu.memory_space<vmem>>, vector<128x256xbf16>,
    return
  }
  func.func @transform_0(%arg0: i32) -> (i32, i32) {
    %c0_i32 = arith.constant 0 : i32
    %c0_i32_0 = arith.constant 0 : i32
    return %arg0, %c0_i32 : i32, i32
  }
  func.func @transform_1(%arg0: i32) -> (i32, i32) {
    %c0_i32 = arith.constant 0 : i32
    %c0_i32_0 = arith.constant 0 : i32
    %c0_i32_1 = arith.constant 0 : i32
    return %c0_i32, %c0_i32_0 : i32, i32
  }
  func.func @transform_2(%arg0: i32) -> (i32, i32) {
    %c0_i32 = arith.constant 0 : i32
    %c0_i32_0 = arith.constant 0 : i32
    return %arg0, %c0_i32 : i32, i32
  }
}

</mosaic_0001>

<llo_original>
// kernel: tpu_custom_call.1
$region0: #{tpu_custom_call.1}
  #allocation0 [shape = 'u32[]', space=smem, size = 0x4, offset = 0x4, fixed_abs, tag = 'smem constant byte address 0x4 - core index']
  #allocation1 [shape = 'u32[144,128]{1,0:T(1,128)}', space=vmem, size = 0x12000, scoped, tag = 'internal scratch']
  %s0 = inlined_call_operand.hbm [shape: f32[128,256], index: 0, kind: input, shape index: {}]
  %s1 = inlined_call_operand.hbm [shape: f32[1,256], index: 1, kind: input, shape index: {}]
  %s2 = inlined_call_operand.hbm [shape: bf16[128,256], index: 2, kind: output, shape index: {}]
  %s3 = sld [smem:[#allocation0]]
  $region26: #{tpu_custom_call.1} parent=0
    _
  %s5 = ssub.s32 1, %s3
  %s6 = scalar_select 0, %s5, %s3
  $region1: #{tpu_custom_call.1} parent=0
    #allocation2 [shape = 'u8[131072]{0}', space=vmem, size = 0x20000, scoped, tag = 'input window, operand 0, single buffered']
    #allocation3 [shape = 's32[1]{0}', space=sflag, size = 0x4, scoped, tag = 'scoped memory for tpu_custom_call.1']
    #allocation4 [shape = 's32[1]{0}', space=sflag, size = 0x4, scoped, tag = 'scoped memory for tpu_custom_call.1']
    #allocation5 [shape = 'u8[1024]{0}', space=vmem, size = 0x400, scoped, tag = 'input window, operand 1, single buffered']
    #allocation6 [shape = 's32[1]{0}', space=sflag, size = 0x4, scoped, tag = 'scoped memory for tpu_custom_call.1']
    #allocation7 [shape = 'u8[65536]{0}', space=vmem, size = 0x10000, scoped, tag = 'output window, operand 0, single buffered']
    %7 = vsyncpa [#allocation3], 0
    %8 = vsyncpa [#allocation6], 0
    %9 = vsyncpa [#allocation4], 0
    // Predicated region
    $region2: #{tpu_custom_call.1} parent=1 // pred_check
      _
    $region3: #{tpu_custom_call.1} parent=1 // pred_check_branch
      %11 = sbr.rel (0) target = $region5
    $region4: #{tpu_custom_call.1} parent=1 // pred_region
      %s13 = ssub.s32 4096, 4096
      %14 = vsyncadd [#allocation3], %s13
      %s15 = sshll.u32 [#allocation2], 4
      %s16 = int_to_ptr.vmem [resolvable:$true] %s15
      %21 = dma.hbm_to_vmem [thread:$0]  %s0, 4096, %s16, [#allocation3], 256, 256, 16
    $region5: #{tpu_custom_call.1} parent=1 // pred_fallthru
      _
    // Predicated region
    $region6: #{tpu_custom_call.1} parent=1 // pred_check
      _
    $region7: #{tpu_custom_call.1} parent=1 // pred_check_branch
      %23 = sbr.rel (0) target = $region9
    $region8: #{tpu_custom_call.1} parent=1 // pred_region
      %s25 = ssub.s32 32, 32
      %26 = vsyncadd [#allocation6], %s25
      %s28 = sshll.u32 [#allocation5], 4
      %s29 = int_to_ptr.vmem [resolvable:$true] %s28
      %31 = dma.hbm_to_vmem [thread:$0]  %s1, 32, %s29, [#allocation6]
    $region9: #{tpu_custom_call.1} parent=1 // pred_fallthru
      _
    // Predicated region
    $region10: #{tpu_custom_call.1} parent=1 // pred_check
      _
    $region11: #{tpu_custom_call.1} parent=1 // pred_check_branch
      %33 = sbr.rel (0) target = $region13
    $region12: #{tpu_custom_call.1} parent=1 // pred_region
      %34 = dma.done [#allocation3], 4096
    $region13: #{tpu_custom_call.1} parent=1 // pred_fallthru
      _
    // Predicated region
    $region14: #{tpu_custom_call.1} parent=1 // pred_check
      _
    $region15: #{tpu_custom_call.1} parent=1 // pred_check_branch
      %36 = sbr.rel (0) target = $region17
    $region16: #{tpu_custom_call.1} parent=1 // pred_region
      %37 = dma.done [#allocation6], 32
    $region17: #{tpu_custom_call.1} parent=1 // pred_fallthru
      _
    %v38 = vld [vmem:[#allocation2] sm:$0xff]
    %v39 = vld [vmem:[#allocation2 + $0x8] sm:$0xff]
    %v40 = vld [vmem:[#allocation2 + $0x10] sm:$0xff]
    %v41 = vld [vmem:[#allocation2 + $0x18] sm:$0xff]
    %v42 = vld [vmem:[#allocation2 + $0x20] sm:$0xff]
    %v43 = vld [vmem:[#allocation2 + $0x28] sm:$0xff]
    %v44 = vld [vmem:[#allocation2 + $0x30] sm:$0xff]
    %v45 = vld [vmem:[#allocation2 + $0x38] sm:$0xff]
    %v46 = vld [vmem:[#allocation2 + $0x40] sm:$0xff]
    %v47 = vld [vmem:[#allocation2 + $0x48] sm:$0xff]
    %v48 = vld [vmem:[#allocation2 + $0x50] sm:$0xff]
    %v49 = vld [vmem:[#allocation2 + $0x58] sm:$0xff]
    %v50 = vld [vmem:[#allocation2 + $0x60] sm:$0xff]
    %v51 = vld [vmem:[#allocation2 + $0x68] sm:$0xff]
    %v52 = vld [vmem:[#allocation2 + $0x70] sm:$0xff]
    %v53 = vld [vmem:[#allocation2 + $0x78] sm:$0xff]
    %v54 = vld [vmem:[#allocation2 + $0x80] sm:$0xff]
    %v55 = vld [vmem:[#allocation2 + $0x88] sm:$0xff]
    %v56 = vld [vmem:[#allocation2 + $0x90] sm:$0xff]
    %v57 = vld [vmem:[#allocation2 + $0x98] sm:$0xff]
    %v58 = vld [vmem:[#allocation2 + $0xa0] sm:$0xff]
    %v59 = vld [vmem:[#allocation2 + $0xa8] sm:$0xff]
    %v60 = vld [vmem:[#allocation2 + $0xb0] sm:$0xff]
    %v61 = vld [vmem:[#allocation2 + $0xb8] sm:$0xff]
    %v62 = vld [vmem:[#allocation2 + $0xc0] sm:$0xff]
    %v63 = vld [vmem:[#allocation2 + $0xc8] sm:$0xff]
    %v64 = vld [vmem:[#allocation2 + $0xd0] sm:$0xff]
    %v65 = vld [vmem:[#allocation2 + $0xd8] sm:$0xff]
    %v66 = vld [vmem:[#allocation2 + $0xe0] sm:$0xff]
    %v67 = vld [vmem:[#allocation2 + $0xe8] sm:$0xff]
    %v68 = vld [vmem:[#allocation2 + $0xf0] sm:$0xff]
    %v69 = vld [vmem:[#allocation2 + $0xf8] sm:$0xff]
    %v70 = vmul.f32 %v38, %v38
    %v71 = vmul.f32 %v39, %v39
    %v72 = vmul.f32 %v40, %v40
    %v73 = vmul.f32 %v41, %v41
    %v74 = vmul.f32 %v42, %v42
    %v75 = vmul.f32 %v43, %v43
    %v76 = vmul.f32 %v44, %v44
    %v77 = vmul.f32 %v45, %v45
    %v78 = vmul.f32 %v46, %v46
    %v79 = vmul.f32 %v47, %v47
    %v80 = vmul.f32 %v48, %v48
    %v81 = vmul.f32 %v49, %v49
    %v82 = vmul.f32 %v50, %v50
    %v83 = vmul.f32 %v51, %v51
    %v84 = vmul.f32 %v52, %v52
    %v85 = vmul.f32 %v53, %v53
    %v86 = vmul.f32 %v54, %v54
    %v87 = vmul.f32 %v55, %v55
    %v88 = vmul.f32 %v56, %v56
    %v89 = vmul.f32 %v57, %v57
    %v90 = vmul.f32 %v58, %v58
    %v91 = vmul.f32 %v59, %v59
    %v92 = vmul.f32 %v60, %v60
    %v93 = vmul.f32 %v61, %v61
    %v94 = vmul.f32 %v62, %v62
    %v95 = vmul.f32 %v63, %v63
    %v96 = vmul.f32 %v64, %v64
    %v97 = vmul.f32 %v65, %v65
    %v98 = vmul.f32 %v66, %v66
    %v99 = vmul.f32 %v67, %v67
    %v100 = vmul.f32 %v68, %v68
    %v101 = vmul.f32 %v69, %v69
    %v102 = vadd.f32 %v70, %v71
    %103 = vadd.xlane.f32.xlu0 %v102
    %v104 = vpop.xlane.xlu0 %103
    %v105 = vadd.f32 %v72, %v73
    %106 = vadd.xlane.f32.xlu0 %v105
    %v107 = vpop.xlane.xlu0 %106
    %v108 = vadd.f32 %v74, %v75
    %109 = vadd.xlane.f32.xlu0 %v108
    %v110 = vpop.xlane.xlu0 %109
    %v111 = vadd.f32 %v76, %v77
    %112 = vadd.xlane.f32.xlu0 %v111
    %v113 = vpop.xlane.xlu0 %112
    %v114 = vadd.f32 %v78, %v79
    %115 = vadd.xlane.f32.xlu0 %v114
    %v116 = vpop.xlane.xlu0 %115
    %v117 = vadd.f32 %v80, %v81
    %118 = vadd.xlane.f32.xlu0 %v117
    %v119 = vpop.xlane.xlu0 %118
    %v120 = vadd.f32 %v82, %v83
    %121 = vadd.xlane.f32.xlu0 %v120
    %v122 = vpop.xlane.xlu0 %121
    %v123 = vadd.f32 %v84, %v85
    %124 = vadd.xlane.f32.xlu0 %v123
    %v125 = vpop.xlane.xlu0 %124
    %v126 = vadd.f32 %v86, %v87
    %127 = vadd.xlane.f32.xlu0 %v126
    %v128 = vpop.xlane.xlu0 %127
    %v129 = vadd.f32 %v88, %v89
    %130 = vadd.xlane.f32.xlu0 %v129
    %v131 = vpop.xlane.xlu0 %130
    %v132 = vadd.f32 %v90, %v91
    %133 = vadd.xlane.f32.xlu0 %v132
    %v134 = vpop.xlane.xlu0 %133
    %v135 = vadd.f32 %v92, %v93
    %136 = vadd.xlane.f32.xlu0 %v135
    %v137 = vpop.xlane.xlu0 %136
    %v138 = vadd.f32 %v94, %v95
    %139 = vadd.xlane.f32.xlu0 %v138
    %v140 = vpop.xlane.xlu0 %139
    %v141 = vadd.f32 %v96, %v97
    %142 = vadd.xlane.f32.xlu0 %v141
    %v143 = vpop.xlane.xlu0 %142
    %v144 = vadd.f32 %v98, %v99
    %145 = vadd.xlane.f32.xlu0 %v144
    %v146 = vpop.xlane.xlu0 %145
    %v147 = vadd.f32 %v100, %v101
    %148 = vadd.xlane.f32.xlu0 %v147
    %v149 = vpop.xlane.xlu0 %148
    %v150 = vrcp.pop 256.0
    %v151 = vmul.f32 %v104, %v150
    %v152 = vmul.f32 %v107, %v150
    %v153 = vmul.f32 %v110, %v150
    %v154 = vmul.f32 %v113, %v150
    %v155 = vmul.f32 %v116, %v150
    %v156 = vmul.f32 %v119, %v150
    %v157 = vmul.f32 %v122, %v150
    %v158 = vmul.f32 %v125, %v150
    %v159 = vmul.f32 %v128, %v150
    %v160 = vmul.f32 %v131, %v150
    %v161 = vmul.f32 %v134, %v150
    %v162 = vmul.f32 %v137, %v150
    %v163 = vmul.f32 %v140, %v150
    %v164 = vmul.f32 %v143, %v150
    %v165 = vmul.f32 %v146, %v150
    %v166 = vmul.f32 %v149, %v150
    %v167 = vadd.f32 %v151, 1e-05
    %v168 = vadd.f32 %v152, 1e-05
    %v169 = vadd.f32 %v153, 1e-05
    %v170 = vadd.f32 %v154, 1e-05
    %v171 = vadd.f32 %v155, 1e-05
    %v172 = vadd.f32 %v156, 1e-05
    %v173 = vadd.f32 %v157, 1e-05
    %v174 = vadd.f32 %v158, 1e-05
    %v175 = vadd.f32 %v159, 1e-05
    %v176 = vadd.f32 %v160, 1e-05
    %v177 = vadd.f32 %v161, 1e-05
    %v178 = vadd.f32 %v162, 1e-05
    %v179 = vadd.f32 %v163, 1e-05
    %v180 = vadd.f32 %v164, 1e-05
    %v181 = vadd.f32 %v165, 1e-05
    %v182 = vadd.f32 %v166, 1e-05
    %v183 = vrsqrt.pop %v167
    %v184 = vrsqrt.pop %v168
    %v185 = vrsqrt.pop %v169
    %v186 = vrsqrt.pop %v170
    %v187 = vrsqrt.pop %v171
    %v188 = vrsqrt.pop %v172
    %v189 = vrsqrt.pop %v173
    %v190 = vrsqrt.pop %v174
    %v191 = vrsqrt.pop %v175
    %v192 = vrsqrt.pop %v176
    %v193 = vrsqrt.pop %v177
    %v194 = vrsqrt.pop %v178
    %v195 = vrsqrt.pop %v179
    %v196 = vrsqrt.pop %v180
    %v197 = vrsqrt.pop %v181
    %v198 = vrsqrt.pop %v182
    %v199 = vmul.f32 %v38, %v183
    %v200 = vmul.f32 %v39, %v183
    %v201 = vmul.f32 %v40, %v184
    %v202 = vmul.f32 %v41, %v184
    %v203 = vmul.f32 %v42, %v185
    %v204 = vmul.f32 %v43, %v185
    %v205 = vmul.f32 %v44, %v186
    %v206 = vmul.f32 %v45, %v186
    %v207 = vmul.f32 %v46, %v187
    %v208 = vmul.f32 %v47, %v187
    %v209 = vmul.f32 %v48, %v188
    %v210 = vmul.f32 %v49, %v188
    %v211 = vmul.f32 %v50, %v189
    %v212 = vmul.f32 %v51, %v189
    %v213 = vmul.f32 %v52, %v190
    %v214 = vmul.f32 %v53, %v190
    %v215 = vmul.f32 %v54, %v191
    %v216 = vmul.f32 %v55, %v191
    %v217 = vmul.f32 %v56, %v192
    %v218 = vmul.f32 %v57, %v192
    %v219 = vmul.f32 %v58, %v193
    %v220 = vmul.f32 %v59, %v193
    %v221 = vmul.f32 %v60, %v194
    %v222 = vmul.f32 %v61, %v194
    %v223 = vmul.f32 %v62, %v195
    %v224 = vmul.f32 %v63, %v195
    %v225 = vmul.f32 %v64, %v196
    %v226 = vmul.f32 %v65, %v196
    %v227 = vmul.f32 %v66, %v197
    %v228 = vmul.f32 %v67, %v197
    %v229 = vmul.f32 %v68, %v198
    %v230 = vmul.f32 %v69, %v198
    %v231 = vld [vmem:[#allocation5] sm:$0x3]
    %v233 = vlaneseq
    %v234 = vshrl.u32 %v233, 7
    %v235 = vsub.s32 0, %v234
    %v236 = vrot.slane %v231, %v235
    %v237 = vlaneseq
    %v238 = vshrl.u32 %v237, 7
    %v239 = vsub.s32 1, %v238
    %v240 = vrot.slane %v231, %v239
    %v243 = vmul.f32 %v199, %v236
    %v244 = vmul.f32 %v200, %v240
    %v245 = vmul.f32 %v201, %v236
    %v246 = vmul.f32 %v202, %v240
    %v247 = vmul.f32 %v203, %v236
    %v248 = vmul.f32 %v204, %v240
    %v249 = vmul.f32 %v205, %v236
    %v250 = vmul.f32 %v206, %v240
    %v251 = vmul.f32 %v207, %v236
    %v252 = vmul.f32 %v208, %v240
    %v253 = vmul.f32 %v209, %v236
    %v254 = vmul.f32 %v210, %v240
    %v255 = vmul.f32 %v211, %v236
    %v256 = vmul.f32 %v212, %v240
    %v257 = vmul.f32 %v213, %v236
    %v258 = vmul.f32 %v214, %v240
    %v259 = vmul.f32 %v215, %v236
    %v260 = vmul.f32 %v216, %v240
    %v261 = vmul.f32 %v217, %v236
    %v262 = vmul.f32 %v218, %v240
    %v263 = vmul.f32 %v219, %v236
    %v264 = vmul.f32 %v220, %v240
    %v265 = vmul.f32 %v221, %v236
    %v266 = vmul.f32 %v222, %v240
    %v267 = vmul.f32 %v223, %v236
    %v268 = vmul.f32 %v224, %v240
    %v269 = vmul.f32 %v225, %v236
    %v270 = vmul.f32 %v226, %v240
    %v271 = vmul.f32 %v227, %v236
    %v272 = vmul.f32 %v228, %v240
    %v273 = vmul.f32 %v229, %v236
    %v274 = vmul.f32 %v230, %v240
    %v275 = vpack.c.bf16 %v245, %v243
    %v276 = vpack.c.bf16 %v246, %v244
    %v277 = vpack.c.bf16 %v249, %v247
    %v278 = vpack.c.bf16 %v250, %v248
    %v279 = vpack.c.bf16 %v253, %v251
    %v280 = vpack.c.bf16 %v254, %v252
    %v281 = vpack.c.bf16 %v257, %v255
    %v282 = vpack.c.bf16 %v258, %v256
    %v283 = vpack.c.bf16 %v261, %v259
    %v284 = vpack.c.bf16 %v262, %v260
    %v285 = vpack.c.bf16 %v265, %v263
    %v286 = vpack.c.bf16 %v266, %v264
    %v287 = vpack.c.bf16 %v269, %v267
    %v288 = vpack.c.bf16 %v270, %v268
    %v289 = vpack.c.bf16 %v273, %v271
    %v290 = vpack.c.bf16 %v274, %v272
    %v307 = vunpack.c.l.b16 %v275
    %v308 = vunpack.c.l.b16 %v276
    %v309 = vunpack.c.h.b16 %v275
    %v310 = vunpack.c.h.b16 %v276
    %v311 = vunpack.c.l.b16 %v277
    %v312 = vunpack.c.l.b16 %v278
    %v313 = vunpack.c.h.b16 %v277
    %v314 = vunpack.c.h.b16 %v278
    %v315 = vunpack.c.l.b16 %v279
    %v316 = vunpack.c.l.b16 %v280
    %v317 = vunpack.c.h.b16 %v279
    %v318 = vunpack.c.h.b16 %v280
    %v319 = vunpack.c.l.b16 %v281
    %v320 = vunpack.c.l.b16 %v282
    %v321 = vunpack.c.h.b16 %v281
    %v322 = vunpack.c.h.b16 %v282
    %v323 = vunpack.c.l.b16 %v283
    %v324 = vunpack.c.l.b16 %v284
    %v325 = vunpack.c.h.b16 %v283
    %v326 = vunpack.c.h.b16 %v284
    %v327 = vunpack.c.l.b16 %v285
    %v328 = vunpack.c.l.b16 %v286
    %v329 = vunpack.c.h.b16 %v285
    %v330 = vunpack.c.h.b16 %v286
    %v331 = vunpack.c.l.b16 %v287
    %v332 = vunpack.c.l.b16 %v288
    %v333 = vunpack.c.h.b16 %v287
    %v334 = vunpack.c.h.b16 %v288
    %v335 = vunpack.c.l.b16 %v289
    %v336 = vunpack.c.l.b16 %v290
    %v337 = vunpack.c.h.b16 %v289
    %v338 = vunpack.c.h.b16 %v290
    %v339 = vpack.c.b16 %v308, %v307
    %v340 = vpack.c.b16 %v310, %v309
    %v341 = vpack.c.b16 %v312, %v311
    %v342 = vpack.c.b16 %v314, %v313
    %v343 = vpack.c.b16 %v316, %v315
    %v344 = vpack.c.b16 %v318, %v317
    %v345 = vpack.c.b16 %v320, %v319
    %v346 = vpack.c.b16 %v322, %v321
    %v347 = vpack.c.b16 %v324, %v323
    %v348 = vpack.c.b16 %v326, %v325
    %v349 = vpack.c.b16 %v328, %v327
    %v350 = vpack.c.b16 %v330, %v329
    %v351 = vpack.c.b16 %v332, %v331
    %v352 = vpack.c.b16 %v334, %v333
    %v353 = vpack.c.b16 %v336, %v335
    %v354 = vpack.c.b16 %v338, %v337
    %371 = vst [vmem:[#allocation7] sm:$0xff] %v339
    %372 = vst [vmem:[#allocation7 + $0x8] sm:$0xff] %v340
    %373 = vst [vmem:[#allocation7 + $0x10] sm:$0xff] %v341
    %374 = vst [vmem:[#allocation7 + $0x18] sm:$0xff] %v342
    %375 = vst [vmem:[#allocation7 + $0x20] sm:$0xff] %v343
    %376 = vst [vmem:[#allocation7 + $0x28] sm:$0xff] %v344
    %377 = vst [vmem:[#allocation7 + $0x30] sm:$0xff] %v345
    %378 = vst [vmem:[#allocation7 + $0x38] sm:$0xff] %v346
    %379 = vst [vmem:[#allocation7 + $0x40] sm:$0xff] %v347
    %380 = vst [vmem:[#allocation7 + $0x48] sm:$0xff] %v348
    %381 = vst [vmem:[#allocation7 + $0x50] sm:$0xff] %v349
    %382 = vst [vmem:[#allocation7 + $0x58] sm:$0xff] %v350
    %383 = vst [vmem:[#allocation7 + $0x60] sm:$0xff] %v351
    %384 = vst [vmem:[#allocation7 + $0x68] sm:$0xff] %v352
    %385 = vst [vmem:[#allocation7 + $0x70] sm:$0xff] %v353
    %386 = vst [vmem:[#allocation7 + $0x78] sm:$0xff] %v354
    // Predicated region
    $region18: #{tpu_custom_call.1} parent=1 // pred_check
      _
    $region19: #{tpu_custom_call.1} parent=1 // pred_check_branch
      %388 = sbr.rel (0) target = $region21
    $region20: #{tpu_custom_call.1} parent=1 // pred_region
      %s390 = ssub.s32 2048, 2048
      %391 = vsyncadd [#allocation4], %s390
      %s392 = sshll.u32 [#allocation7], 4
      %s393 = int_to_ptr.vmem [resolvable:$true] %s392
      %398 = dma.vmem_to_hbm [thread:$0]  %s393, 2048, %s2, [#allocation4], 128, 128, 8
    $region21: #{tpu_custom_call.1} parent=1 // pred_fallthru
      _
    // Predicated region
    $region22: #{tpu_custom_call.1} parent=1 // pred_check
      _
    $region23: #{tpu_custom_call.1} parent=1 // pred_check_branch
      %400 = sbr.rel (0) target = $region25
    $region24: #{tpu_custom_call.1} parent=1 // pred_region
      %401 = dma.done [#allocation4], 2048
    $region25: #{tpu_custom_call.1} parent=1 // pred_fallthru
      _
    %402 = vsyncpa [#allocation3], 1
    %403 = vsyncpa [#allocation6], 1
    %404 = vsyncpa [#allocation4], 1

</llo_original>
